<compile_context>
chip_gen: v6e
topology: v6e:2x2x1
jax: 0.10.0
libtpu: 0.0.40
codegen_flags: <defaults>
</compile_context>

<pallas_src>
import numpy as np
import jax
import jax.numpy as jnp
from jax.experimental import pallas as pl
from jax.experimental.pallas import tpu as pltpu


def _round_up(x: int, m: int) -> int:
    return ((x + m - 1) // m) * m


def _cdiv(a: int, b: int) -> int:
    return (a + b - 1) // b


def aml_kernel(phi_min_ref, delta_ref, mask_ref, out_ref):
    """Grid step (i, j): batch tile i (lanes), atom-word chunk j (sublanes).

    mask_ref : (WC, TB) int32; bit b of word w = membership of atom 32*w_glb+b.
    delta_ref: (WC, 32) f32;  delta[w, b] = phi[32*w_glb+b] - phi_min (>=0, 0 pad).
    out_ref  : (1, TB) f32 lane-dense row; resident across j (running max of
               delta contributions), phi_min added back on the last chunk.
    """
    j = pl.program_id(1)

    @pl.when(j == 0)
    def _init():
        out_ref[...] = jnp.zeros_like(out_ref)

    packed = mask_ref[...]                       # (WC, TB) int32
    delta = delta_ref[...]                       # (WC, 32) f32

    # Unrolled bit-plane expansion: per-word running max of bit * delta.
    acc = jnp.zeros(packed.shape, jnp.float32)   # (WC, TB)
    for b in range(32):
        bit = (packed >> b) & 1                  # (WC, TB) in {0, 1}
        acc = jnp.maximum(acc, bit.astype(jnp.float32) * delta[:, b:b + 1])

    chunk_max = jnp.max(acc, axis=0, keepdims=True)          # (1, TB) sublane reduce
    out_ref[...] = jnp.maximum(out_ref[...], chunk_max)

    @pl.when(j == pl.num_programs(1) - 1)
    def _finalize():
        out_ref[...] = out_ref[...] + phi_min_ref[0, 0]


def encode_batch_sets(batch_sets, num_atoms, *, batch_tile=2048, max_words_per_chunk=256):
    """One-shot, vectorized host-side encoding of batch_sets into a bit-packed
    (words, batch) int32 mask.  Cache and reuse the result across training
    steps if batch_sets does not change."""
    if num_atoms < 1:
        raise ValueError("num_atoms must be >= 1")
    B = len(batch_sets)

    # Batch tiling: lanes => multiple of 128; prefer >=2 tiles (v7x megacore).
    b128 = _round_up(max(B, 1), 128)
    TB = min(_round_up(max(batch_tile, 128), 128), b128)
    if b128 // TB < 2 and b128 > 128:
        TB = _round_up(b128 // 2, 128)
    B_pad = _round_up(max(B, 1), TB)
    num_batch_tiles = B_pad // TB

    # Atom-word chunking: chunk is either the full word axis or a multiple of 8.
    W = _cdiv(num_atoms, 32)
    if W <= max_words_per_chunk:
        WC, W_pad = W, W
    else:
        WC = max(8, (max_words_per_chunk // 8) * 8)
        W_pad = _round_up(W, WC)
    num_word_chunks = W_pad // WC

    # Vectorized bit-pack: single fancy-index scatter (handles duplicates).
    lengths = np.asarray([len(s) for s in batch_sets], dtype=np.int64)
    total = int(lengths.sum()) if B else 0
    batch_idx = np.repeat(np.arange(B, dtype=np.int64), lengths) if B else np.zeros(0, np.int64)
    atom_idx = np.fromiter((i for s in batch_sets for i in s), dtype=np.int64, count=total)
    if total and ((atom_idx < 0).any() or (atom_idx >= num_atoms).any()):
        raise IndexError("atom index out of range [0, num_atoms)")

    packed = np.zeros((W_pad, B_pad), dtype=np.uint32)
    if total:
        word = atom_idx // 32
        bit = (atom_idx % 32).astype(np.uint32)
        vals = np.left_shift(np.uint32(1), bit).astype(np.uint32)
        np.bitwise_or.at(packed, (word, batch_idx), vals)
    mask = jnp.asarray(packed.view(np.int32))    # (W_pad, B_pad) int32

    meta = dict(B=B, B_pad=B_pad, TB=TB, num_batch_tiles=num_batch_tiles,
                W=W, W_pad=W_pad, WC=WC, num_word_chunks=num_word_chunks)
    return mask, meta


def aml_forward_packed(phi, mask, num_atoms, meta):
    """Run the kernel on an already-encoded mask (see encode_batch_sets)."""
    B, B_pad, TB = meta["B"], meta["B_pad"], meta["TB"]
    W_pad, WC = meta["W_pad"], meta["WC"]
    num_batch_tiles, num_word_chunks = meta["num_batch_tiles"], meta["num_word_chunks"]

    phi_f32 = jnp.asarray(phi, dtype=jnp.float32).reshape(-1)
    phi_min = jnp.min(phi_f32)
    # delta[w, b] = phi[32*w + b] - phi_min  (>= 0; 0 on padding atoms)
    delta = jnp.zeros((W_pad * 32,), jnp.float32).at[:num_atoms].set(phi_f32 - phi_min)
    delta = delta.reshape(W_pad, 32)
    phi_min_arr = phi_min.reshape(1, 1)

    cost = pl.CostEstimate(
        flops=4 * B_pad * W_pad * 32,
        transcendentals=0,
        bytes_accessed=B_pad * W_pad * 4 + num_batch_tiles * W_pad * 32 * 4 + B_pad * 4,
    )

    out = pl.pallas_call(
        aml_kernel,
        out_shape=jax.ShapeDtypeStruct((1, B_pad), jnp.float32),
        grid=(num_batch_tiles, num_word_chunks),
        in_specs=[
            pl.BlockSpec(memory_space=pltpu.MemorySpace.SMEM),     # phi_min (1,1)
            pl.BlockSpec((WC, 32), lambda i, j: (j, 0)),           # delta word-chunk
            pl.BlockSpec((WC, TB), lambda i, j: (j, i)),           # packed mask tile
        ],
        out_specs=pl.BlockSpec((1, TB), lambda i, j: (0, i)),      # lane-dense, resident over j
        compiler_params=pltpu.CompilerParams(
            dimension_semantics=("parallel", "arbitrary"),
            vmem_limit_bytes=48 * 1024 * 1024,
        ),
        cost_estimate=cost,
    )(phi_min_arr, delta, mask)

    return out[0, :B]


def aml_forward(phi, batch_sets, num_atoms, *, batch_tile=2048, max_words_per_chunk=256):
    """phi: (num_atoms,) array; batch_sets: list[list[int]] -> (B,) f32."""
    if len(batch_sets) == 0:
        return jnp.zeros((0,), jnp.float32)
    mask, meta = encode_batch_sets(batch_sets, num_atoms,
                                   batch_tile=batch_tile,
                                   max_words_per_chunk=max_words_per_chunk)
    return aml_forward_packed(phi, mask, num_atoms, meta)


def aml_reference(phi, batch_sets):
    phi_np = np.asarray(phi, dtype=np.float32)
    return np.asarray(
        [phi_np[np.asarray(s, dtype=np.int64)].max() if len(s) else phi_np.min()
         for s in batch_sets], dtype=np.float32)


if __name__ == "__main__":
    key = jax.random.PRNGKey(0)

    # --- Small deterministic test (matches the PyTorch module's usage). -----
    num_atoms = 32
    phi = 0.01 * jax.random.normal(key, (num_atoms,), dtype=jnp.float32)
    batch_sets = [
        [0, 5, 7],
        [],                 # empty -> phi.min()
        [31],
        [2, 3, 4, 5, 6],
        [10, 20, 30],
        [1],
        [8, 9, 10, 11, 12, 13, 14, 15],
        [17, 29],
    ]
    out = jax.block_until_ready(aml_forward(phi, batch_sets, num_atoms))
    ref = aml_reference(phi, batch_sets)
    assert out.shape == (len(batch_sets),)
    assert np.allclose(np.asarray(out), ref, atol=1e-6), (out, ref)

    # --- Larger test: >=2 batch tiles ("parallel") and >=2 atom-word chunks
    #     ("arbitrary" axis with the resident running-max output). ----------
    rng = np.random.default_rng(0)
    num_atoms2 = 600
    phi2 = 0.01 * jax.random.normal(jax.random.PRNGKey(1), (num_atoms2,), dtype=jnp.float32)
    batch_sets2 = []
    for _ in range(300):
        n = int(rng.integers(0, 12))
        batch_sets2.append(sorted(rng.choice(num_atoms2, size=n, replace=False).tolist()))
    out2 = jax.block_until_ready(
        aml_forward(phi2, batch_sets2, num_atoms2, batch_tile=256, max_words_per_chunk=8))
    ref2 = aml_reference(phi2, batch_sets2)
    assert out2.shape == (len(batch_sets2),)
    assert np.allclose(np.asarray(out2), ref2, atol=1e-6)

    print("KERNEL_OK")
</pallas_src>

<mosaic_0001>
module attributes {stable_mosaic.version = 11 : i64} {
  func.func @aml_kernel(%arg0: i32, %arg1: i32, %arg2: memref<1x1xf32, #tpu.memory_space<smem>>, %arg3: memref<1x32xf32, #tpu.memory_space<vmem>>, %arg4: memref<1x128xi32, #tpu.memory_space<vmem>>, %arg5: memref<1x128xf32, #tpu.memory_space<vmem>>) attributes {dimension_semantics = [#tpu.dimension_semantics<parallel>, #tpu.dimension_semantics<arbitrary>], iteration_bounds = array<i64: 1, 1>, scalar_prefetch = 0 : i64, scratch_operands = 0 : i64, tpu.core_type = #tpu.core_type<tc>, window_params = [{transform_indices = @transform_0, window_bounds = array<i64: 1, 1>}, {transform_indices = @transform_1, window_bounds = array<i64: 1, 32>}, {transform_indices = @transform_2, window_bounds = array<i64: 1, 128>}, {transform_indices = @transform_3, window_bounds = array<i64: 1, 128>}]} {
    %c0_i32 = arith.constant 0 : i32
    %0 = arith.cmpi eq, %arg1, %c0_i32 : i32
    %1 = arith.extui %0 : i1 to i32
    %c0_i32_0 = arith.constant 0 : i32
    %2 = arith.cmpi ne, %1, %c0_i32_0 : i32
    scf.if %2 {
      %cst_44 = arith.constant 0.000000e+00 : f32
      %302 = vector.broadcast %cst_44 : f32 to vector<1x128xf32>
      %c0_45 = arith.constant 0 : index
      %c0_46 = arith.constant 0 : index
      %303 = vector.load %arg5[%c0_45, %c0_46] : memref<1x128xf32, #tpu.memory_space<vmem>>, vector<1x128xf32>
      tpu.vector_store %arg5[%c0_45, %c0_46], %302 {strides = array<i32>} : memref<1x128xf32, #tpu.memory_space<vmem>>, vector<1x128xf32>,
    } else {
    }
    %c0 = arith.constant 0 : index
    %c0_1 = arith.constant 0 : index
    %3 = vector.load %arg4[%c0, %c0_1] : memref<1x128xi32, #tpu.memory_space<vmem>>, vector<1x128xi32>
    %c0_2 = arith.constant 0 : index
    %c0_3 = arith.constant 0 : index
    %4 = vector.load %arg3[%c0_2, %c0_3] : memref<1x32xf32, #tpu.memory_space<vmem>>, vector<1x32xf32>
    %cst = arith.constant 0.000000e+00 : f32
    %5 = vector.broadcast %cst : f32 to vector<1x128xf32>
    %c0_i32_4 = arith.constant 0 : i32
    %6 = vector.broadcast %c0_i32_4 : i32 to vector<1x128xi32>
    %7 = arith.shrsi %3, %6 : vector<1x128xi32>
    %c1_i32 = arith.constant 1 : i32
    %8 = vector.broadcast %c1_i32 : i32 to vector<1x128xi32>
    %9 = arith.andi %7, %8 : vector<1x128xi32>
    %10 = arith.sitofp %9 : vector<1x128xi32> to vector<1x128xf32>
    %11 = vector.extract_strided_slice %4 {offsets = [0, 0], sizes = [1, 1], strides = [1, 1]} : vector<1x32xf32> to vector<1x1xf32>
    %12 = vector.broadcast %11 : vector<1x1xf32> to vector<1x128xf32>
    %13 = arith.mulf %10, %12 : vector<1x128xf32>
    %14 = arith.maximumf %5, %13 : vector<1x128xf32>
    %c1_i32_5 = arith.constant 1 : i32
    %15 = vector.broadcast %c1_i32_5 : i32 to vector<1x128xi32>
    %16 = arith.shrsi %3, %15 : vector<1x128xi32>
    %c1_i32_6 = arith.constant 1 : i32
    %17 = vector.broadcast %c1_i32_6 : i32 to vector<1x128xi32>
    %18 = arith.andi %16, %17 : vector<1x128xi32>
    %19 = arith.sitofp %18 : vector<1x128xi32> to vector<1x128xf32>
    %20 = vector.extract_strided_slice %4 {offsets = [0, 1], sizes = [1, 1], strides = [1, 1]} : vector<1x32xf32> to vector<1x1xf32>
    %21 = vector.broadcast %20 : vector<1x1xf32> to vector<1x128xf32>
    %22 = arith.mulf %19, %21 : vector<1x128xf32>
    %23 = arith.maximumf %14, %22 : vector<1x128xf32>
    %c2_i32 = arith.constant 2 : i32
    %24 = vector.broadcast %c2_i32 : i32 to vector<1x128xi32>
    %25 = arith.shrsi %3, %24 : vector<1x128xi32>
    %c1_i32_7 = arith.constant 1 : i32
    %26 = vector.broadcast %c1_i32_7 : i32 to vector<1x128xi32>
    %27 = arith.andi %25, %26 : vector<1x128xi32>
    %28 = arith.sitofp %27 : vector<1x128xi32> to vector<1x128xf32>
    %29 = vector.extract_strided_slice %4 {offsets = [0, 2], sizes = [1, 1], strides = [1, 1]} : vector<1x32xf32> to vector<1x1xf32>
    %30 = vector.broadcast %29 : vector<1x1xf32> to vector<1x128xf32>
    %31 = arith.mulf %28, %30 : vector<1x128xf32>
    %32 = arith.maximumf %23, %31 : vector<1x128xf32>
    %c3_i32 = arith.constant 3 : i32
    %33 = vector.broadcast %c3_i32 : i32 to vector<1x128xi32>
    %34 = arith.shrsi %3, %33 : vector<1x128xi32>
    %c1_i32_8 = arith.constant 1 : i32
    %35 = vector.broadcast %c1_i32_8 : i32 to vector<1x128xi32>
    %36 = arith.andi %34, %35 : vector<1x128xi32>
    %37 = arith.sitofp %36 : vector<1x128xi32> to vector<1x128xf32>
    %38 = vector.extract_strided_slice %4 {offsets = [0, 3], sizes = [1, 1], strides = [1, 1]} : vector<1x32xf32> to vector<1x1xf32>
    %39 = vector.broadcast %38 : vector<1x1xf32> to vector<1x128xf32>
    %40 = arith.mulf %37, %39 : vector<1x128xf32>
    %41 = arith.maximumf %32, %40 : vector<1x128xf32>
    %c4_i32 = arith.constant 4 : i32
    %42 = vector.broadcast %c4_i32 : i32 to vector<1x128xi32>
    %43 = arith.shrsi %3, %42 : vector<1x128xi32>
    %c1_i32_9 = arith.constant 1 : i32
    %44 = vector.broadcast %c1_i32_9 : i32 to vector<1x128xi32>
    %45 = arith.andi %43, %44 : vector<1x128xi32>
    %46 = arith.sitofp %45 : vector<1x128xi32> to vector<1x128xf32>
    %47 = vector.extract_strided_slice %4 {offsets = [0, 4], sizes = [1, 1], strides = [1, 1]} : vector<1x32xf32> to vector<1x1xf32>
    %48 = vector.broadcast %47 : vector<1x1xf32> to vector<1x128xf32>
    %49 = arith.mulf %46, %48 : vector<1x128xf32>
    %50 = arith.maximumf %41, %49 : vector<1x128xf32>
    %c5_i32 = arith.constant 5 : i32
    %51 = vector.broadcast %c5_i32 : i32 to vector<1x128xi32>
    %52 = arith.shrsi %3, %51 : vector<1x128xi32>
    %c1_i32_10 = arith.constant 1 : i32
    %53 = vector.broadcast %c1_i32_10 : i32 to vector<1x128xi32>
    %54 = arith.andi %52, %53 : vector<1x128xi32>
    %55 = arith.sitofp %54 : vector<1x128xi32> to vector<1x128xf32>
    %56 = vector.extract_strided_slice %4 {offsets = [0, 5], sizes = [1, 1], strides = [1, 1]} : vector<1x32xf32> to vector<1x1xf32>
    %57 = vector.broadcast %56 : vector<1x1xf32> to vector<1x128xf32>
    %58 = arith.mulf %55, %57 : vector<1x128xf32>
    %59 = arith.maximumf %50, %58 : vector<1x128xf32>
    %c6_i32 = arith.constant 6 : i32
    %60 = vector.broadcast %c6_i32 : i32 to vector<1x128xi32>
    %61 = arith.shrsi %3, %60 : vector<1x128xi32>
    %c1_i32_11 = arith.constant 1 : i32
    %62 = vector.broadcast %c1_i32_11 : i32 to vector<1x128xi32>
    %63 = arith.andi %61, %62 : vector<1x128xi32>
    %64 = arith.sitofp %63 : vector<1x128xi32> to vector<1x128xf32>
    %65 = vector.extract_strided_slice %4 {offsets = [0, 6], sizes = [1, 1], strides = [1, 1]} : vector<1x32xf32> to vector<1x1xf32>
    %66 = vector.broadcast %65 : vector<1x1xf32> to vector<1x128xf32>
    %67 = arith.mulf %64, %66 : vector<1x128xf32>
    %68 = arith.maximumf %59, %67 : vector<1x128xf32>
    %c7_i32 = arith.constant 7 : i32
    %69 = vector.broadcast %c7_i32 : i32 to vector<1x128xi32>
    %70 = arith.shrsi %3, %69 : vector<1x128xi32>
    %c1_i32_12 = arith.constant 1 : i32
    %71 = vector.broadcast %c1_i32_12 : i32 to vector<1x128xi32>
    %72 = arith.andi %70, %71 : vector<1x128xi32>
    %73 = arith.sitofp %72 : vector<1x128xi32> to vector<1x128xf32>
    %74 = vector.extract_strided_slice %4 {offsets = [0, 7], sizes = [1, 1], strides = [1, 1]} : vector<1x32xf32> to vector<1x1xf32>
    %75 = vector.broadcast %74 : vector<1x1xf32> to vector<1x128xf32>
    %76 = arith.mulf %73, %75 : vector<1x128xf32>
    %77 = arith.maximumf %68, %76 : vector<1x128xf32>
    %c8_i32 = arith.constant 8 : i32
    %78 = vector.broadcast %c8_i32 : i32 to vector<1x128xi32>
    %79 = arith.shrsi %3, %78 : vector<1x128xi32>
    %c1_i32_13 = arith.constant 1 : i32
    %80 = vector.broadcast %c1_i32_13 : i32 to vector<1x128xi32>
    %81 = arith.andi %79, %80 : vector<1x128xi32>
    %82 = arith.sitofp %81 : vector<1x128xi32> to vector<1x128xf32>
    %83 = vector.extract_strided_slice %4 {offsets = [0, 8], sizes = [1, 1], strides = [1, 1]} : vector<1x32xf32> to vector<1x1xf32>
    %84 = vector.broadcast %83 : vector<1x1xf32> to vector<1x128xf32>
    %85 = arith.mulf %82, %84 : vector<1x128xf32>
    %86 = arith.maximumf %77, %85 : vector<1x128xf32>
    %c9_i32 = arith.constant 9 : i32
    %87 = vector.broadcast %c9_i32 : i32 to vector<1x128xi32>
    %88 = arith.shrsi %3, %87 : vector<1x128xi32>
    %c1_i32_14 = arith.constant 1 : i32
    %89 = vector.broadcast %c1_i32_14 : i32 to vector<1x128xi32>
    %90 = arith.andi %88, %89 : vector<1x128xi32>
    %91 = arith.sitofp %90 : vector<1x128xi32> to vector<1x128xf32>
    %92 = vector.extract_strided_slice %4 {offsets = [0, 9], sizes = [1, 1], strides = [1, 1]} : vector<1x32xf32> to vector<1x1xf32>
    %93 = vector.broadcast %92 : vector<1x1xf32> to vector<1x128xf32>
    %94 = arith.mulf %91, %93 : vector<1x128xf32>
    %95 = arith.maximumf %86, %94 : vector<1x128xf32>
    %c10_i32 = arith.constant 10 : i32
    %96 = vector.broadcast %c10_i32 : i32 to vector<1x128xi32>
    %97 = arith.shrsi %3, %96 : vector<1x128xi32>
    %c1_i32_15 = arith.constant 1 : i32
    %98 = vector.broadcast %c1_i32_15 : i32 to vector<1x128xi32>
    %99 = arith.andi %97, %98 : vector<1x128xi32>
    %100 = arith.sitofp %99 : vector<1x128xi32> to vector<1x128xf32>
    %101 = vector.extract_strided_slice %4 {offsets = [0, 10], sizes = [1, 1], strides = [1, 1]} : vector<1x32xf32> to vector<1x1xf32>
    %102 = vector.broadcast %101 : vector<1x1xf32> to vector<1x128xf32>
    %103 = arith.mulf %100, %102 : vector<1x128xf32>
    %104 = arith.maximumf %95, %103 : vector<1x128xf32>
    %c11_i32 = arith.constant 11 : i32
    %105 = vector.broadcast %c11_i32 : i32 to vector<1x128xi32>
    %106 = arith.shrsi %3, %105 : vector<1x128xi32>
    %c1_i32_16 = arith.constant 1 : i32
    %107 = vector.broadcast %c1_i32_16 : i32 to vector<1x128xi32>
    %108 = arith.andi %106, %107 : vector<1x128xi32>
    %109 = arith.sitofp %108 : vector<1x128xi32> to vector<1x128xf32>
    %110 = vector.extract_strided_slice %4 {offsets = [0, 11], sizes = [1, 1], strides = [1, 1]} : vector<1x32xf32> to vector<1x1xf32>
    %111 = vector.broadcast %110 : vector<1x1xf32> to vector<1x128xf32>
    %112 = arith.mulf %109, %111 : vector<1x128xf32>
    %113 = arith.maximumf %104, %112 : vector<1x128xf32>
    %c12_i32 = arith.constant 12 : i32
    %114 = vector.broadcast %c12_i32 : i32 to vector<1x128xi32>
    %115 = arith.shrsi %3, %114 : vector<1x128xi32>
    %c1_i32_17 = arith.constant 1 : i32
    %116 = vector.broadcast %c1_i32_17 : i32 to vector<1x128xi32>
    %117 = arith.andi %115, %116 : vector<1x128xi32>
    %118 = arith.sitofp %117 : vector<1x128xi32> to vector<1x128xf32>
    %119 = vector.extract_strided_slice %4 {offsets = [0, 12], sizes = [1, 1], strides = [1, 1]} : vector<1x32xf32> to vector<1x1xf32>
    %120 = vector.broadcast %119 : vector<1x1xf32> to vector<1x128xf32>
    %121 = arith.mulf %118, %120 : vector<1x128xf32>
    %122 = arith.maximumf %113, %121 : vector<1x128xf32>
    %c13_i32 = arith.constant 13 : i32
    %123 = vector.broadcast %c13_i32 : i32 to vector<1x128xi32>
    %124 = arith.shrsi %3, %123 : vector<1x128xi32>
    %c1_i32_18 = arith.constant 1 : i32
    %125 = vector.broadcast %c1_i32_18 : i32 to vector<1x128xi32>
    %126 = arith.andi %124, %125 : vector<1x128xi32>
    %127 = arith.sitofp %126 : vector<1x128xi32> to vector<1x128xf32>
    %128 = vector.extract_strided_slice %4 {offsets = [0, 13], sizes = [1, 1], strides = [1, 1]} : vector<1x32xf32> to vector<1x1xf32>
    %129 = vector.broadcast %128 : vector<1x1xf32> to vector<1x128xf32>
    %130 = arith.mulf %127, %129 : vector<1x128xf32>
    %131 = arith.maximumf %122, %130 : vector<1x128xf32>
    %c14_i32 = arith.constant 14 : i32
    %132 = vector.broadcast %c14_i32 : i32 to vector<1x128xi32>
    %133 = arith.shrsi %3, %132 : vector<1x128xi32>
    %c1_i32_19 = arith.constant 1 : i32
    %134 = vector.broadcast %c1_i32_19 : i32 to vector<1x128xi32>
    %135 = arith.andi %133, %134 : vector<1x128xi32>
    %136 = arith.sitofp %135 : vector<1x128xi32> to vector<1x128xf32>
    %137 = vector.extract_strided_slice %4 {offsets = [0, 14], sizes = [1, 1], strides = [1, 1]} : vector<1x32xf32> to vector<1x1xf32>
    %138 = vector.broadcast %137 : vector<1x1xf32> to vector<1x128xf32>
    %139 = arith.mulf %136, %138 : vector<1x128xf32>
    %140 = arith.maximumf %131, %139 : vector<1x128xf32>
    %c15_i32 = arith.constant 15 : i32
    %141 = vector.broadcast %c15_i32 : i32 to vector<1x128xi32>
    %142 = arith.shrsi %3, %141 : vector<1x128xi32>
    %c1_i32_20 = arith.constant 1 : i32
    %143 = vector.broadcast %c1_i32_20 : i32 to vector<1x128xi32>
    %144 = arith.andi %142, %143 : vector<1x128xi32>
    %145 = arith.sitofp %144 : vector<1x128xi32> to vector<1x128xf32>
    %146 = vector.extract_strided_slice %4 {offsets = [0, 15], sizes = [1, 1], strides = [1, 1]} : vector<1x32xf32> to vector<1x1xf32>
    %147 = vector.broadcast %146 : vector<1x1xf32> to vector<1x128xf32>
    %148 = arith.mulf %145, %147 : vector<1x128xf32>
    %149 = arith.maximumf %140, %148 : vector<1x128xf32>
    %c16_i32 = arith.constant 16 : i32
    %150 = vector.broadcast %c16_i32 : i32 to vector<1x128xi32>
    %151 = arith.shrsi %3, %150 : vector<1x128xi32>
    %c1_i32_21 = arith.constant 1 : i32
    %152 = vector.broadcast %c1_i32_21 : i32 to vector<1x128xi32>
    %153 = arith.andi %151, %152 : vector<1x128xi32>
    %154 = arith.sitofp %153 : vector<1x128xi32> to vector<1x128xf32>
    %155 = vector.extract_strided_slice %4 {offsets = [0, 16], sizes = [1, 1], strides = [1, 1]} : vector<1x32xf32> to vector<1x1xf32>
    %156 = vector.broadcast %155 : vector<1x1xf32> to vector<1x128xf32>
    %157 = arith.mulf %154, %156 : vector<1x128xf32>
    %158 = arith.maximumf %149, %157 : vector<1x128xf32>
    %c17_i32 = arith.constant 17 : i32
    %159 = vector.broadcast %c17_i32 : i32 to vector<1x128xi32>
    %160 = arith.shrsi %3, %159 : vector<1x128xi32>
    %c1_i32_22 = arith.constant 1 : i32
    %161 = vector.broadcast %c1_i32_22 : i32 to vector<1x128xi32>
    %162 = arith.andi %160, %161 : vector<1x128xi32>
    %163 = arith.sitofp %162 : vector<1x128xi32> to vector<1x128xf32>
    %164 = vector.extract_strided_slice %4 {offsets = [0, 17], sizes = [1, 1], strides = [1, 1]} : vector<1x32xf32> to vector<1x1xf32>
    %165 = vector.broadcast %164 : vector<1x1xf32> to vector<1x128xf32>
    %166 = arith.mulf %163, %165 : vector<1x128xf32>
    %167 = arith.maximumf %158, %166 : vector<1x128xf32>
    %c18_i32 = arith.constant 18 : i32
    %168 = vector.broadcast %c18_i32 : i32 to vector<1x128xi32>
    %169 = arith.shrsi %3, %168 : vector<1x128xi32>
    %c1_i32_23 = arith.constant 1 : i32
    %170 = vector.broadcast %c1_i32_23 : i32 to vector<1x128xi32>
    %171 = arith.andi %169, %170 : vector<1x128xi32>
    %172 = arith.sitofp %171 : vector<1x128xi32> to vector<1x128xf32>
    %173 = vector.extract_strided_slice %4 {offsets = [0, 18], sizes = [1, 1], strides = [1, 1]} : vector<1x32xf32> to vector<1x1xf32>
    %174 = vector.broadcast %173 : vector<1x1xf32> to vector<1x128xf32>
    %175 = arith.mulf %172, %174 : vector<1x128xf32>
    %176 = arith.maximumf %167, %175 : vector<1x128xf32>
    %c19_i32 = arith.constant 19 : i32
    %177 = vector.broadcast %c19_i32 : i32 to vector<1x128xi32>
    %178 = arith.shrsi %3, %177 : vector<1x128xi32>
    %c1_i32_24 = arith.constant 1 : i32
    %179 = vector.broadcast %c1_i32_24 : i32 to vector<1x128xi32>
    %180 = arith.andi %178, %179 : vector<1x128xi32>
    %181 = arith.sitofp %180 : vector<1x128xi32> to vector<1x128xf32>
    %182 = vector.extract_strided_slice %4 {offsets = [0, 19], sizes = [1, 1], strides = [1, 1]} : vector<1x32xf32> to vector<1x1xf32>
    %183 = vector.broadcast %182 : vector<1x1xf32> to vector<1x128xf32>
    %184 = arith.mulf %181, %183 : vector<1x128xf32>
    %185 = arith.maximumf %176, %184 : vector<1x128xf32>
    %c20_i32 = arith.constant 20 : i32
    %186 = vector.broadcast %c20_i32 : i32 to vector<1x128xi32>
    %187 = arith.shrsi %3, %186 : vector<1x128xi32>
    %c1_i32_25 = arith.constant 1 : i32
    %188 = vector.broadcast %c1_i32_25 : i32 to vector<1x128xi32>
    %189 = arith.andi %187, %188 : vector<1x128xi32>
    %190 = arith.sitofp %189 : vector<1x128xi32> to vector<1x128xf32>
    %191 = vector.extract_strided_slice %4 {offsets = [0, 20], sizes = [1, 1], strides = [1, 1]} : vector<1x32xf32> to vector<1x1xf32>
    %192 = vector.broadcast %191 : vector<1x1xf32> to vector<1x128xf32>
    %193 = arith.mulf %190, %192 : vector<1x128xf32>
    %194 = arith.maximumf %185, %193 : vector<1x128xf32>
    %c21_i32 = arith.constant 21 : i32
    %195 = vector.broadcast %c21_i32 : i32 to vector<1x128xi32>
    %196 = arith.shrsi %3, %195 : vector<1x128xi32>
    %c1_i32_26 = arith.constant 1 : i32
    %197 = vector.broadcast %c1_i32_26 : i32 to vector<1x128xi32>
    %198 = arith.andi %196, %197 : vector<1x128xi32>
    %199 = arith.sitofp %198 : vector<1x128xi32> to vector<1x128xf32>
    %200 = vector.extract_strided_slice %4 {offsets = [0, 21], sizes = [1, 1], strides = [1, 1]} : vector<1x32xf32> to vector<1x1xf32>
    %201 = vector.broadcast %200 : vector<1x1xf32> to vector<1x128xf32>
    %202 = arith.mulf %199, %201 : vector<1x128xf32>
    %203 = arith.maximumf %194, %202 : vector<1x128xf32>
    %c22_i32 = arith.constant 22 : i32
    %204 = vector.broadcast %c22_i32 : i32 to vector<1x128xi32>
    %205 = arith.shrsi %3, %204 : vector<1x128xi32>
    %c1_i32_27 = arith.constant 1 : i32
    %206 = vector.broadcast %c1_i32_27 : i32 to vector<1x128xi32>
    %207 = arith.andi %205, %206 : vector<1x128xi32>
    %208 = arith.sitofp %207 : vector<1x128xi32> to vector<1x128xf32>
    %209 = vector.extract_strided_slice %4 {offsets = [0, 22], sizes = [1, 1], strides = [1, 1]} : vector<1x32xf32> to vector<1x1xf32>
    %210 = vector.broadcast %209 : vector<1x1xf32> to vector<1x128xf32>
    %211 = arith.mulf %208, %210 : vector<1x128xf32>
    %212 = arith.maximumf %203, %211 : vector<1x128xf32>
    %c23_i32 = arith.constant 23 : i32
    %213 = vector.broadcast %c23_i32 : i32 to vector<1x128xi32>
    %214 = arith.shrsi %3, %213 : vector<1x128xi32>
    %c1_i32_28 = arith.constant 1 : i32
    %215 = vector.broadcast %c1_i32_28 : i32 to vector<1x128xi32>
    %216 = arith.andi %214, %215 : vector<1x128xi32>
    %217 = arith.sitofp %216 : vector<1x128xi32> to vector<1x128xf32>
    %218 = vector.extract_strided_slice %4 {offsets = [0, 23], sizes = [1, 1], strides = [1, 1]} : vector<1x32xf32> to vector<1x1xf32>
    %219 = vector.broadcast %218 : vector<1x1xf32> to vector<1x128xf32>
    %220 = arith.mulf %217, %219 : vector<1x128xf32>
    %221 = arith.maximumf %212, %220 : vector<1x128xf32>
    %c24_i32 = arith.constant 24 : i32
    %222 = vector.broadcast %c24_i32 : i32 to vector<1x128xi32>
    %223 = arith.shrsi %3, %222 : vector<1x128xi32>
    %c1_i32_29 = arith.constant 1 : i32
    %224 = vector.broadcast %c1_i32_29 : i32 to vector<1x128xi32>
    %225 = arith.andi %223, %224 : vector<1x128xi32>
    %226 = arith.sitofp %225 : vector<1x128xi32> to vector<1x128xf32>
    %227 = vector.extract_strided_slice %4 {offsets = [0, 24], sizes = [1, 1], strides = [1, 1]} : vector<1x32xf32> to vector<1x1xf32>
    %228 = vector.broadcast %227 : vector<1x1xf32> to vector<1x128xf32>
    %229 = arith.mulf %226, %228 : vector<1x128xf32>
    %230 = arith.maximumf %221, %229 : vector<1x128xf32>
    %c25_i32 = arith.constant 25 : i32
    %231 = vector.broadcast %c25_i32 : i32 to vector<1x128xi32>
    %232 = arith.shrsi %3, %231 : vector<1x128xi32>
    %c1_i32_30 = arith.constant 1 : i32
    %233 = vector.broadcast %c1_i32_30 : i32 to vector<1x128xi32>
    %234 = arith.andi %232, %233 : vector<1x128xi32>
    %235 = arith.sitofp %234 : vector<1x128xi32> to vector<1x128xf32>
    %236 = vector.extract_strided_slice %4 {offsets = [0, 25], sizes = [1, 1], strides = [1, 1]} : vector<1x32xf32> to vector<1x1xf32>
    %237 = vector.broadcast %236 : vector<1x1xf32> to vector<1x128xf32>
    %238 = arith.mulf %235, %237 : vector<1x128xf32>
    %239 = arith.maximumf %230, %238 : vector<1x128xf32>
    %c26_i32 = arith.constant 26 : i32
    %240 = vector.broadcast %c26_i32 : i32 to vector<1x128xi32>
    %241 = arith.shrsi %3, %240 : vector<1x128xi32>
    %c1_i32_31 = arith.constant 1 : i32
    %242 = vector.broadcast %c1_i32_31 : i32 to vector<1x128xi32>
    %243 = arith.andi %241, %242 : vector<1x128xi32>
    %244 = arith.sitofp %243 : vector<1x128xi32> to vector<1x128xf32>
    %245 = vector.extract_strided_slice %4 {offsets = [0, 26], sizes = [1, 1], strides = [1, 1]} : vector<1x32xf32> to vector<1x1xf32>
    %246 = vector.broadcast %245 : vector<1x1xf32> to vector<1x128xf32>
    %247 = arith.mulf %244, %246 : vector<1x128xf32>
    %248 = arith.maximumf %239, %247 : vector<1x128xf32>
    %c27_i32 = arith.constant 27 : i32
    %249 = vector.broadcast %c27_i32 : i32 to vector<1x128xi32>
    %250 = arith.shrsi %3, %249 : vector<1x128xi32>
    %c1_i32_32 = arith.constant 1 : i32
    %251 = vector.broadcast %c1_i32_32 : i32 to vector<1x128xi32>
    %252 = arith.andi %250, %251 : vector<1x128xi32>
    %253 = arith.sitofp %252 : vector<1x128xi32> to vector<1x128xf32>
    %254 = vector.extract_strided_slice %4 {offsets = [0, 27], sizes = [1, 1], strides = [1, 1]} : vector<1x32xf32> to vector<1x1xf32>
    %255 = vector.broadcast %254 : vector<1x1xf32> to vector<1x128xf32>
    %256 = arith.mulf %253, %255 : vector<1x128xf32>
    %257 = arith.maximumf %248, %256 : vector<1x128xf32>
    %c28_i32 = arith.constant 28 : i32
    %258 = vector.broadcast %c28_i32 : i32 to vector<1x128xi32>
    %259 = arith.shrsi %3, %258 : vector<1x128xi32>
    %c1_i32_33 = arith.constant 1 : i32
    %260 = vector.broadcast %c1_i32_33 : i32 to vector<1x128xi32>
    %261 = arith.andi %259, %260 : vector<1x128xi32>
    %262 = arith.sitofp %261 : vector<1x128xi32> to vector<1x128xf32>
    %263 = vector.extract_strided_slice %4 {offsets = [0, 28], sizes = [1, 1], strides = [1, 1]} : vector<1x32xf32> to vector<1x1xf32>
    %264 = vector.broadcast %263 : vector<1x1xf32> to vector<1x128xf32>
    %265 = arith.mulf %262, %264 : vector<1x128xf32>
    %266 = arith.maximumf %257, %265 : vector<1x128xf32>
    %c29_i32 = arith.constant 29 : i32
    %267 = vector.broadcast %c29_i32 : i32 to vector<1x128xi32>
    %268 = arith.shrsi %3, %267 : vector<1x128xi32>
    %c1_i32_34 = arith.constant 1 : i32
    %269 = vector.broadcast %c1_i32_34 : i32 to vector<1x128xi32>
    %270 = arith.andi %268, %269 : vector<1x128xi32>
    %271 = arith.sitofp %270 : vector<1x128xi32> to vector<1x128xf32>
    %272 = vector.extract_strided_slice %4 {offsets = [0, 29], sizes = [1, 1], strides = [1, 1]} : vector<1x32xf32> to vector<1x1xf32>
    %273 = vector.broadcast %272 : vector<1x1xf32> to vector<1x128xf32>
    %274 = arith.mulf %271, %273 : vector<1x128xf32>
    %275 = arith.maximumf %266, %274 : vector<1x128xf32>
    %c30_i32 = arith.constant 30 : i32
    %276 = vector.broadcast %c30_i32 : i32 to vector<1x128xi32>
    %277 = arith.shrsi %3, %276 : vector<1x128xi32>
    %c1_i32_35 = arith.constant 1 : i32
    %278 = vector.broadcast %c1_i32_35 : i32 to vector<1x128xi32>
    %279 = arith.andi %277, %278 : vector<1x128xi32>
    %280 = arith.sitofp %279 : vector<1x128xi32> to vector<1x128xf32>
    %281 = vector.extract_strided_slice %4 {offsets = [0, 30], sizes = [1, 1], strides = [1, 1]} : vector<1x32xf32> to vector<1x1xf32>
    %282 = vector.broadcast %281 : vector<1x1xf32> to vector<1x128xf32>
    %283 = arith.mulf %280, %282 : vector<1x128xf32>
    %284 = arith.maximumf %275, %283 : vector<1x128xf32>
    %c31_i32 = arith.constant 31 : i32
    %285 = vector.broadcast %c31_i32 : i32 to vector<1x128xi32>
    %286 = arith.shrsi %3, %285 : vector<1x128xi32>
    %c1_i32_36 = arith.constant 1 : i32
    %287 = vector.broadcast %c1_i32_36 : i32 to vector<1x128xi32>
    %288 = arith.andi %286, %287 : vector<1x128xi32>
    %289 = arith.sitofp %288 : vector<1x128xi32> to vector<1x128xf32>
    %290 = vector.extract_strided_slice %4 {offsets = [0, 31], sizes = [1, 1], strides = [1, 1]} : vector<1x32xf32> to vector<1x1xf32>
    %291 = vector.broadcast %290 : vector<1x1xf32> to vector<1x128xf32>
    %292 = arith.mulf %289, %291 : vector<1x128xf32>
    %293 = arith.maximumf %284, %292 : vector<1x128xf32>
    %cst_37 = arith.constant dense<0xFF800000> : vector<128xf32>
    %294 = vector.multi_reduction <maximumf>, %293, %cst_37 [0] : vector<1x128xf32> to vector<128xf32>
    %295 = vector.shape_cast %294 : vector<128xf32> to vector<1x128xf32>
    %c0_38 = arith.constant 0 : index
    %c0_39 = arith.constant 0 : index
    %296 = vector.load %arg5[%c0_38, %c0_39] : memref<1x128xf32, #tpu.memory_space<vmem>>, vector<1x128xf32>
    %297 = arith.maximumf %296, %295 : vector<1x128xf32>
    %c0_40 = arith.constant 0 : index
    %c0_41 = arith.constant 0 : index
    %298 = vector.load %arg5[%c0_40, %c0_41] : memref<1x128xf32, #tpu.memory_space<vmem>>, vector<1x128xf32>
    tpu.vector_store %arg5[%c0_40, %c0_41], %297 {strides = array<i32>} : memref<1x128xf32, #tpu.memory_space<vmem>>, vector<1x128xf32>,
    %c0_i32_42 = arith.constant 0 : i32
    %299 = arith.cmpi eq, %arg1, %c0_i32_42 : i32
    %300 = arith.extui %299 : i1 to i32
    %c0_i32_43 = arith.constant 0 : i32
    %301 = arith.cmpi ne, %300, %c0_i32_43 : i32
    scf.if %301 {
      %c0_44 = arith.constant 0 : index
      %c0_45 = arith.constant 0 : index
      %302 = vector.load %arg5[%c0_44, %c0_45] : memref<1x128xf32, #tpu.memory_space<vmem>>, vector<1x128xf32>
      %c0_46 = arith.constant 0 : index
      %c0_47 = arith.constant 0 : index
      %303 = memref.load %arg2[%c0_46, %c0_47] : memref<1x1xf32, #tpu.memory_space<smem>>
      %304 = vector.broadcast %303 : f32 to vector<1x128xf32>
      %305 = arith.addf %302, %304 : vector<1x128xf32>
      %c0_48 = arith.constant 0 : index
      %c0_49 = arith.constant 0 : index
      %306 = vector.load %arg5[%c0_48, %c0_49] : memref<1x128xf32, #tpu.memory_space<vmem>>, vector<1x128xf32>
      tpu.vector_store %arg5[%c0_48, %c0_49], %305 {strides = array<i32>} : memref<1x128xf32, #tpu.memory_space<vmem>>, vector<1x128xf32>,
    } else {
    }
    return
  }
  func.func @transform_0(%arg0: i32, %arg1: i32) -> (i32, i32) {
    %c0_i32 = arith.constant 0 : i32
    %c0_i32_0 = arith.constant 0 : i32
    %c0_i32_1 = arith.constant 0 : i32
    return %c0_i32, %c0_i32_0 : i32, i32
  }
  func.func @transform_1(%arg0: i32, %arg1: i32) -> (i32, i32) {
    %c0_i32 = arith.constant 0 : i32
    %c0_i32_0 = arith.constant 0 : i32
    return %arg1, %c0_i32 : i32, i32
  }
  func.func @transform_2(%arg0: i32, %arg1: i32) -> (i32, i32) {
    %c0_i32 = arith.constant 0 : i32
    return %arg1, %arg0 : i32, i32
  }
  func.func @transform_3(%arg0: i32, %arg1: i32) -> (i32, i32) {
    %c0_i32 = arith.constant 0 : i32
    %c0_i32_0 = arith.constant 0 : i32
    return %c0_i32, %arg0 : i32, i32
  }
}

</mosaic_0001>

<llo_original>
// kernel: tpu_custom_call.1
$region0: #{tpu_custom_call.1}
  #allocation0 [shape = 'u32[]', space=smem, size = 0x4, offset = 0x4, fixed_abs, tag = 'smem constant byte address 0x4 - core index']
  #allocation1 [shape = 'u32[144,128]{1,0:T(1,128)}', space=vmem, size = 0x12000, scoped, tag = 'internal scratch']
  #allocation2 [shape = 'f32[1,1]{1,0:T(1,128)S(6)}', space=smem, size = 0x200, scoped, tag = 'scoped memory for tpu_custom_call.1']
  %s0 = inlined_call_operand.<no memory space> [shape: f32[1,1], index: 0, kind: input, shape index: {}]
  %s1 = inlined_call_operand.vmem [shape: f32[1,32], index: 1, kind: input, shape index: {}]
  %s2 = inlined_call_operand.vmem [shape: s32[1,128], index: 2, kind: input, shape index: {}]
  %s3 = inlined_call_operand.hbm [shape: f32[1,128], index: 3, kind: output, shape index: {}]
  %s4 = sld [smem:[#allocation0]]
  $region30: #{tpu_custom_call.1} parent=0
    _
  %s6 = ssub.s32 1, %s4
  %s7 = scalar_select 0, %s6, %s4
  %8 = sst [smem:[#allocation2]] %s0
  $region1: #{tpu_custom_call.1} parent=0
    #allocation3 [shape = 'u8[512]{0}', space=vmem, size = 0x400, scoped, tag = 'output window, operand 0, single buffered']
    #allocation4 [shape = 's32[1]{0}', space=sflag, size = 0x4, scoped, tag = 'scoped memory for tpu_custom_call.1']
    %9 = vsyncpa [#allocation4], 0
    // Predicated region
    $region2: #{tpu_custom_call.1} parent=1 // pred_check
      _
    $region3: #{tpu_custom_call.1} parent=1 // pred_check_branch
      %11 = sbr.rel (0) target = $region5
    $region4: #{tpu_custom_call.1} parent=1 // pred_region
      _
    $region5: #{tpu_custom_call.1} parent=1 // pred_fallthru
      _
    // Predicated region
    $region6: #{tpu_custom_call.1} parent=1 // pred_check
      _
    $region7: #{tpu_custom_call.1} parent=1 // pred_check_branch
      %13 = sbr.rel (0) target = $region9
    $region8: #{tpu_custom_call.1} parent=1 // pred_region
      _
    $region9: #{tpu_custom_call.1} parent=1 // pred_fallthru
      _
    // Predicated region
    $region10: #{tpu_custom_call.1} parent=1 // pred_check
      _
    $region11: #{tpu_custom_call.1} parent=1 // pred_check_branch
      %15 = sbr.rel (0) target = $region13
    $region12: #{tpu_custom_call.1} parent=1 // pred_region
      _
    $region13: #{tpu_custom_call.1} parent=1 // pred_fallthru
      _
    %p16 = scmp.eq.s32.totalorder 0, 0
    // Predicated region
    $region14: #{tpu_custom_call.1} parent=1 // pred_check
      %p17 = pneg %p16
    $region15: #{tpu_custom_call.1} parent=1 // pred_check_branch
      %19 = sbr.rel (%p17) target = $region17
    $region16: #{tpu_custom_call.1} parent=1 // pred_region
      %20 = vst [vmem:[#allocation3] sm:$0x1] 0.0
    $region17: #{tpu_custom_call.1} parent=1 // pred_fallthru
      _
    %v21 = vld [vmem:[%s2] sm:$0x1]
    %v22 = vld [vmem:[%s1] sm:$0x1]
    %v23 = vand.u32 %v21, 1
    %v24 = vcvt.s32.f32 %v23
    %26 = vset.pattern.permute.xlu0 0
    %27 = vperm.xlu0 %26, %v22
    %v28 = vpop.permute.xlu0 %27
    %v30 = vlaneseq
    %v31 = vshrl.u32 %v30, 7
    %v32 = vsub.s32 0, %v31
    %v33 = vrot.slane %v28, %v32
    %v34 = vmul.f32 %v24, %v33
    %v35 = vmax.f32 %v34, 0.0
    %v36 = vshra.s32 %v21, 1
    %v37 = vand.u32 %v36, 1
    %v38 = vcvt.s32.f32 %v37
    %39 = vset.pattern.permute.xlu0 1
    %40 = vperm.xlu0 %39, %v22
    %v41 = vpop.permute.xlu0 %40
    %v43 = vlaneseq
    %v44 = vshrl.u32 %v43, 7
    %v45 = vsub.s32 0, %v44
    %v46 = vrot.slane %v41, %v45
    %v47 = vmul.f32 %v38, %v46
    %v48 = vmax.f32 %v35, %v47
    %v49 = vshra.s32 %v21, 2
    %v50 = vand.u32 %v49, 1
    %v51 = vcvt.s32.f32 %v50
    %52 = vset.pattern.permute.xlu0 2
    %53 = vperm.xlu0 %52, %v22
    %v54 = vpop.permute.xlu0 %53
    %v56 = vlaneseq
    %v57 = vshrl.u32 %v56, 7
    %v58 = vsub.s32 0, %v57
    %v59 = vrot.slane %v54, %v58
    %v60 = vmul.f32 %v51, %v59
    %v61 = vmax.f32 %v48, %v60
    %v62 = vshra.s32 %v21, 3
    %v63 = vand.u32 %v62, 1
    %v64 = vcvt.s32.f32 %v63
    %65 = vset.pattern.permute.xlu0 3
    %66 = vperm.xlu0 %65, %v22
    %v67 = vpop.permute.xlu0 %66
    %v69 = vlaneseq
    %v70 = vshrl.u32 %v69, 7
    %v71 = vsub.s32 0, %v70
    %v72 = vrot.slane %v67, %v71
    %v73 = vmul.f32 %v64, %v72
    %v74 = vmax.f32 %v61, %v73
    %v75 = vshra.s32 %v21, 4
    %v76 = vand.u32 %v75, 1
    %v77 = vcvt.s32.f32 %v76
    %78 = vset.pattern.permute.xlu0 4
    %79 = vperm.xlu0 %78, %v22
    %v80 = vpop.permute.xlu0 %79
    %v82 = vlaneseq
    %v83 = vshrl.u32 %v82, 7
    %v84 = vsub.s32 0, %v83
    %v85 = vrot.slane %v80, %v84
    %v86 = vmul.f32 %v77, %v85
    %v87 = vmax.f32 %v74, %v86
    %v88 = vshra.s32 %v21, 5
    %v89 = vand.u32 %v88, 1
    %v90 = vcvt.s32.f32 %v89
    %91 = vset.pattern.permute.xlu0 5
    %92 = vperm.xlu0 %91, %v22
    %v93 = vpop.permute.xlu0 %92
    %v95 = vlaneseq
    %v96 = vshrl.u32 %v95, 7
    %v97 = vsub.s32 0, %v96
    %v98 = vrot.slane %v93, %v97
    %v99 = vmul.f32 %v90, %v98
    %v100 = vmax.f32 %v87, %v99
    %v101 = vshra.s32 %v21, 6
    %v102 = vand.u32 %v101, 1
    %v103 = vcvt.s32.f32 %v102
    %104 = vset.pattern.permute.xlu0 6
    %105 = vperm.xlu0 %104, %v22
    %v106 = vpop.permute.xlu0 %105
    %v108 = vlaneseq
    %v109 = vshrl.u32 %v108, 7
    %v110 = vsub.s32 0, %v109
    %v111 = vrot.slane %v106, %v110
    %v112 = vmul.f32 %v103, %v111
    %v113 = vmax.f32 %v100, %v112
    %v114 = vshra.s32 %v21, 7
    %v115 = vand.u32 %v114, 1
    %v116 = vcvt.s32.f32 %v115
    %117 = vset.pattern.permute.xlu0 7
    %118 = vperm.xlu0 %117, %v22
    %v119 = vpop.permute.xlu0 %118
    %v121 = vlaneseq
    %v122 = vshrl.u32 %v121, 7
    %v123 = vsub.s32 0, %v122
    %v124 = vrot.slane %v119, %v123
    %v125 = vmul.f32 %v116, %v124
    %v126 = vmax.f32 %v113, %v125
    %v127 = vshra.s32 %v21, 8
    %v128 = vand.u32 %v127, 1
    %v129 = vcvt.s32.f32 %v128
    %130 = vset.pattern.permute.xlu0 8
    %131 = vperm.xlu0 %130, %v22
    %v132 = vpop.permute.xlu0 %131
    %v134 = vlaneseq
    %v135 = vshrl.u32 %v134, 7
    %v136 = vsub.s32 0, %v135
    %v137 = vrot.slane %v132, %v136
    %v138 = vmul.f32 %v129, %v137
    %v139 = vmax.f32 %v126, %v138
    %v140 = vshra.s32 %v21, 9
    %v141 = vand.u32 %v140, 1
    %v142 = vcvt.s32.f32 %v141
    %143 = vset.pattern.permute.xlu0 9
    %144 = vperm.xlu0 %143, %v22
    %v145 = vpop.permute.xlu0 %144
    %v147 = vlaneseq
    %v148 = vshrl.u32 %v147, 7
    %v149 = vsub.s32 0, %v148
    %v150 = vrot.slane %v145, %v149
    %v151 = vmul.f32 %v142, %v150
    %v152 = vmax.f32 %v139, %v151
    %v153 = vshra.s32 %v21, 10
    %v154 = vand.u32 %v153, 1
    %v155 = vcvt.s32.f32 %v154
    %156 = vset.pattern.permute.xlu0 10
    %157 = vperm.xlu0 %156, %v22
    %v158 = vpop.permute.xlu0 %157
    %v160 = vlaneseq
    %v161 = vshrl.u32 %v160, 7
    %v162 = vsub.s32 0, %v161
    %v163 = vrot.slane %v158, %v162
    %v164 = vmul.f32 %v155, %v163
    %v165 = vmax.f32 %v152, %v164
    %v166 = vshra.s32 %v21, 11
    %v167 = vand.u32 %v166, 1
    %v168 = vcvt.s32.f32 %v167
    %169 = vset.pattern.permute.xlu0 11
    %170 = vperm.xlu0 %169, %v22
    %v171 = vpop.permute.xlu0 %170
    %v173 = vlaneseq
    %v174 = vshrl.u32 %v173, 7
    %v175 = vsub.s32 0, %v174
    %v176 = vrot.slane %v171, %v175
    %v177 = vmul.f32 %v168, %v176
    %v178 = vmax.f32 %v165, %v177
    %v179 = vshra.s32 %v21, 12
    %v180 = vand.u32 %v179, 1
    %v181 = vcvt.s32.f32 %v180
    %182 = vset.pattern.permute.xlu0 12
    %183 = vperm.xlu0 %182, %v22
    %v184 = vpop.permute.xlu0 %183
    %v186 = vlaneseq
    %v187 = vshrl.u32 %v186, 7
    %v188 = vsub.s32 0, %v187
    %v189 = vrot.slane %v184, %v188
    %v190 = vmul.f32 %v181, %v189
    %v191 = vmax.f32 %v178, %v190
    %v192 = vshra.s32 %v21, 13
    %v193 = vand.u32 %v192, 1
    %v194 = vcvt.s32.f32 %v193
    %195 = vset.pattern.permute.xlu0 13
    %196 = vperm.xlu0 %195, %v22
    %v197 = vpop.permute.xlu0 %196
    %v199 = vlaneseq
    %v200 = vshrl.u32 %v199, 7
    %v201 = vsub.s32 0, %v200
    %v202 = vrot.slane %v197, %v201
    %v203 = vmul.f32 %v194, %v202
    %v204 = vmax.f32 %v191, %v203
    %v205 = vshra.s32 %v21, 14
    %v206 = vand.u32 %v205, 1
    %v207 = vcvt.s32.f32 %v206
    %208 = vset.pattern.permute.xlu0 14
    %209 = vperm.xlu0 %208, %v22
    %v210 = vpop.permute.xlu0 %209
    %v212 = vlaneseq
    %v213 = vshrl.u32 %v212, 7
    %v214 = vsub.s32 0, %v213
    %v215 = vrot.slane %v210, %v214
    %v216 = vmul.f32 %v207, %v215
    %v217 = vmax.f32 %v204, %v216
    %v218 = vshra.s32 %v21, 15
    %v219 = vand.u32 %v218, 1
    %v220 = vcvt.s32.f32 %v219
    %221 = vset.pattern.permute.xlu0 15
    %222 = vperm.xlu0 %221, %v22
    %v223 = vpop.permute.xlu0 %222
    %v225 = vlaneseq
    %v226 = vshrl.u32 %v225, 7
    %v227 = vsub.s32 0, %v226
    %v228 = vrot.slane %v223, %v227
    %v229 = vmul.f32 %v220, %v228
    %v230 = vmax.f32 %v217, %v229
    %v231 = vshra.s32 %v21, 16
    %v232 = vand.u32 %v231, 1
    %v233 = vcvt.s32.f32 %v232
    %234 = vset.pattern.permute.xlu0 16
    %235 = vperm.xlu0 %234, %v22
    %v236 = vpop.permute.xlu0 %235
    %v238 = vlaneseq
    %v239 = vshrl.u32 %v238, 7
    %v240 = vsub.s32 0, %v239
    %v241 = vrot.slane %v236, %v240
    %v242 = vmul.f32 %v233, %v241
    %v243 = vmax.f32 %v230, %v242
    %v244 = vshra.s32 %v21, 17
    %v245 = vand.u32 %v244, 1
    %v246 = vcvt.s32.f32 %v245
    %247 = vset.pattern.permute.xlu0 17
    %248 = vperm.xlu0 %247, %v22
    %v249 = vpop.permute.xlu0 %248
    %v251 = vlaneseq
    %v252 = vshrl.u32 %v251, 7
    %v253 = vsub.s32 0, %v252
    %v254 = vrot.slane %v249, %v253
    %v255 = vmul.f32 %v246, %v254
    %v256 = vmax.f32 %v243, %v255
    %v257 = vshra.s32 %v21, 18
    %v258 = vand.u32 %v257, 1
    %v259 = vcvt.s32.f32 %v258
    %260 = vset.pattern.permute.xlu0 18
    %261 = vperm.xlu0 %260, %v22
    %v262 = vpop.permute.xlu0 %261
    %v264 = vlaneseq
    %v265 = vshrl.u32 %v264, 7
    %v266 = vsub.s32 0, %v265
    %v267 = vrot.slane %v262, %v266
    %v268 = vmul.f32 %v259, %v267
    %v269 = vmax.f32 %v256, %v268
    %v270 = vshra.s32 %v21, 19
    %v271 = vand.u32 %v270, 1
    %v272 = vcvt.s32.f32 %v271
    %273 = vset.pattern.permute.xlu0 19
    %274 = vperm.xlu0 %273, %v22
    %v275 = vpop.permute.xlu0 %274
    %v277 = vlaneseq
    %v278 = vshrl.u32 %v277, 7
    %v279 = vsub.s32 0, %v278
    %v280 = vrot.slane %v275, %v279
    %v281 = vmul.f32 %v272, %v280
    %v282 = vmax.f32 %v269, %v281
    %v283 = vshra.s32 %v21, 20
    %v284 = vand.u32 %v283, 1
    %v285 = vcvt.s32.f32 %v284
    %286 = vset.pattern.permute.xlu0 20
    %287 = vperm.xlu0 %286, %v22
    %v288 = vpop.permute.xlu0 %287
    %v290 = vlaneseq
    %v291 = vshrl.u32 %v290, 7
    %v292 = vsub.s32 0, %v291
    %v293 = vrot.slane %v288, %v292
    %v294 = vmul.f32 %v285, %v293
    %v295 = vmax.f32 %v282, %v294
    %v296 = vshra.s32 %v21, 21
    %v297 = vand.u32 %v296, 1
    %v298 = vcvt.s32.f32 %v297
    %299 = vset.pattern.permute.xlu0 21
    %300 = vperm.xlu0 %299, %v22
    %v301 = vpop.permute.xlu0 %300
    %v303 = vlaneseq
    %v304 = vshrl.u32 %v303, 7
    %v305 = vsub.s32 0, %v304
    %v306 = vrot.slane %v301, %v305
    %v307 = vmul.f32 %v298, %v306
    %v308 = vmax.f32 %v295, %v307
    %v309 = vshra.s32 %v21, 22
    %v310 = vand.u32 %v309, 1
    %v311 = vcvt.s32.f32 %v310
    %312 = vset.pattern.permute.xlu0 22
    %313 = vperm.xlu0 %312, %v22
    %v314 = vpop.permute.xlu0 %313
    %v316 = vlaneseq
    %v317 = vshrl.u32 %v316, 7
    %v318 = vsub.s32 0, %v317
    %v319 = vrot.slane %v314, %v318
    %v320 = vmul.f32 %v311, %v319
    %v321 = vmax.f32 %v308, %v320
    %v322 = vshra.s32 %v21, 23
    %v323 = vand.u32 %v322, 1
    %v324 = vcvt.s32.f32 %v323
    %325 = vset.pattern.permute.xlu0 23
    %326 = vperm.xlu0 %325, %v22
    %v327 = vpop.permute.xlu0 %326
    %v329 = vlaneseq
    %v330 = vshrl.u32 %v329, 7
    %v331 = vsub.s32 0, %v330
    %v332 = vrot.slane %v327, %v331
    %v333 = vmul.f32 %v324, %v332
    %v334 = vmax.f32 %v321, %v333
    %v335 = vshra.s32 %v21, 24
    %v336 = vand.u32 %v335, 1
    %v337 = vcvt.s32.f32 %v336
    %338 = vset.pattern.permute.xlu0 24
    %339 = vperm.xlu0 %338, %v22
    %v340 = vpop.permute.xlu0 %339
    %v342 = vlaneseq
    %v343 = vshrl.u32 %v342, 7
    %v344 = vsub.s32 0, %v343
    %v345 = vrot.slane %v340, %v344
    %v346 = vmul.f32 %v337, %v345
    %v347 = vmax.f32 %v334, %v346
    %v348 = vshra.s32 %v21, 25
    %v349 = vand.u32 %v348, 1
    %v350 = vcvt.s32.f32 %v349
    %351 = vset.pattern.permute.xlu0 25
    %352 = vperm.xlu0 %351, %v22
    %v353 = vpop.permute.xlu0 %352
    %v355 = vlaneseq
    %v356 = vshrl.u32 %v355, 7
    %v357 = vsub.s32 0, %v356
    %v358 = vrot.slane %v353, %v357
    %v359 = vmul.f32 %v350, %v358
    %v360 = vmax.f32 %v347, %v359
    %v361 = vshra.s32 %v21, 26
    %v362 = vand.u32 %v361, 1
    %v363 = vcvt.s32.f32 %v362
    %364 = vset.pattern.permute.xlu0 26
    %365 = vperm.xlu0 %364, %v22
    %v366 = vpop.permute.xlu0 %365
    %v368 = vlaneseq
    %v369 = vshrl.u32 %v368, 7
    %v370 = vsub.s32 0, %v369
    %v371 = vrot.slane %v366, %v370
    %v372 = vmul.f32 %v363, %v371
    %v373 = vmax.f32 %v360, %v372
    %v374 = vshra.s32 %v21, 27
    %v375 = vand.u32 %v374, 1
    %v376 = vcvt.s32.f32 %v375
    %377 = vset.pattern.permute.xlu0 27
    %378 = vperm.xlu0 %377, %v22
    %v379 = vpop.permute.xlu0 %378
    %v381 = vlaneseq
    %v382 = vshrl.u32 %v381, 7
    %v383 = vsub.s32 0, %v382
    %v384 = vrot.slane %v379, %v383
    %v385 = vmul.f32 %v376, %v384
    %v386 = vmax.f32 %v373, %v385
    %v387 = vshra.s32 %v21, 28
    %v388 = vand.u32 %v387, 1
    %v389 = vcvt.s32.f32 %v388
    %390 = vset.pattern.permute.xlu0 28
    %391 = vperm.xlu0 %390, %v22
    %v392 = vpop.permute.xlu0 %391
    %v394 = vlaneseq
    %v395 = vshrl.u32 %v394, 7
    %v396 = vsub.s32 0, %v395
    %v397 = vrot.slane %v392, %v396
    %v398 = vmul.f32 %v389, %v397
    %v399 = vmax.f32 %v386, %v398
    %v400 = vshra.s32 %v21, 29
    %v401 = vand.u32 %v400, 1
    %v402 = vcvt.s32.f32 %v401
    %403 = vset.pattern.permute.xlu0 29
    %404 = vperm.xlu0 %403, %v22
    %v405 = vpop.permute.xlu0 %404
    %v407 = vlaneseq
    %v408 = vshrl.u32 %v407, 7
    %v409 = vsub.s32 0, %v408
    %v410 = vrot.slane %v405, %v409
    %v411 = vmul.f32 %v402, %v410
    %v412 = vmax.f32 %v399, %v411
    %v413 = vshra.s32 %v21, 30
    %v414 = vand.u32 %v413, 1
    %v415 = vcvt.s32.f32 %v414
    %416 = vset.pattern.permute.xlu0 30
    %417 = vperm.xlu0 %416, %v22
    %v418 = vpop.permute.xlu0 %417
    %v420 = vlaneseq
    %v421 = vshrl.u32 %v420, 7
    %v422 = vsub.s32 0, %v421
    %v423 = vrot.slane %v418, %v422
    %v424 = vmul.f32 %v415, %v423
    %v425 = vmax.f32 %v412, %v424
    %v426 = vshra.s32 %v21, 31
    %v427 = vand.u32 %v426, 1
    %v428 = vcvt.s32.f32 %v427
    %429 = vset.pattern.permute.xlu0 31
    %430 = vperm.xlu0 %429, %v22
    %v431 = vpop.permute.xlu0 %430
    %v433 = vlaneseq
    %v434 = vshrl.u32 %v433, 7
    %v435 = vsub.s32 0, %v434
    %v436 = vrot.slane %v431, %v435
    %v437 = vmul.f32 %v428, %v436
    %v438 = vmax.f32 %v425, %v437
    %v439 = vld [vmem:[#allocation3] sm:$0x1]
    %v440 = vmax.f32 %v439, %v438
    %441 = vst [vmem:[#allocation3] sm:$0x1] %v440
    // Predicated region
    $region18: #{tpu_custom_call.1} parent=1 // pred_check
      %p442 = pneg %p16
    $region19: #{tpu_custom_call.1} parent=1 // pred_check_branch
      %444 = sbr.rel (%p442) target = $region21
    $region20: #{tpu_custom_call.1} parent=1 // pred_region
      %v445 = vld [vmem:[#allocation3] sm:$0x1]
      %s446 = sld [smem:[#allocation2]]
      %v447 = vstv %s446
      %v448 = vadd.f32 %v445, %v447
      %449 = vst [vmem:[#allocation3] sm:$0x1] %v448
    $region21: #{tpu_custom_call.1} parent=1 // pred_fallthru
      _
    // Predicated region
    $region22: #{tpu_custom_call.1} parent=1 // pred_check
      _
    $region23: #{tpu_custom_call.1} parent=1 // pred_check_branch
      %451 = sbr.rel (0) target = $region25
    $region24: #{tpu_custom_call.1} parent=1 // pred_region
      %s453 = ssub.s32 16, 16
      %454 = vsyncadd [#allocation4], %s453
      %s456 = sshll.u32 [#allocation3], 4
      %s457 = int_to_ptr.vmem [resolvable:$true] %s456
      %459 = dma.vmem_to_hbm [thread:$0]  %s457, 16, %s3, [#allocation4]
    $region25: #{tpu_custom_call.1} parent=1 // pred_fallthru
      _
    // Predicated region
    $region26: #{tpu_custom_call.1} parent=1 // pred_check
      _
    $region27: #{tpu_custom_call.1} parent=1 // pred_check_branch
      %461 = sbr.rel (0) target = $region29
    $region28: #{tpu_custom_call.1} parent=1 // pred_region
      %462 = dma.done [#allocation4], 16
    $region29: #{tpu_custom_call.1} parent=1 // pred_fallthru
      _
    %463 = vsyncpa [#allocation4], 1

</llo_original>
